<compile_context>
chip_gen: v5e
topology: v5e:2x2
jax: 0.10.0
libtpu: 0.0.40
codegen_flags: <defaults>
</compile_context>

<pallas_src>
import numpy as np
import jax
import jax.numpy as jnp
from jax.experimental import pallas as pl
from jax.experimental.pallas import tpu as pltpu

# ------------------------- synthetic "ViT-B-16" config (shrunk) ----------------
IMG_SIZE = 32
PATCH = 8
N_PATCH = (IMG_SIZE // PATCH) ** 2          # 16 patches
PATCH_DIM = 3 * PATCH * PATCH               # 192
WIDTH = 64                                  # transformer width (synthetic)
EMBED = 32                                  # joint embedding dim (model)
EMBED_PAD = 128                             # lane-dense embedding axis (zero pad)
CTX_LEN = 8                                 # tokenizer context length
VOCAB = 97                                  # synthetic vocab
VOCAB_PAD = 128                             # MXU-friendly K for the text matmul
TXT_DIM = 32                                # text transformer width (synthetic)
T_PAD = 128                                 # lane-dense prompt axis for probs
LOGIT_SCALE = float(np.exp(np.log(1.0 / 0.07)))   # CLIP logit_scale init, exp'd
NEG_INF = -1e30

CLIP_MEAN = np.array([0.48145466, 0.4578275, 0.40821073], np.float32)
CLIP_STD = np.array([0.26862954, 0.26130258, 0.27577711], np.float32)


# --------------------------------- fused kernel --------------------------------
def _icnm_fused_kernel(pooled_ref, w_img_ref, b_img_ref,
                       w_txt_t_ref, counts_t_ref, mask_ref, probs_ref):
    # ---- image encoder: (B_PAD, PATCH_DIM)bf16 @ (PATCH_DIM, EMBED_PAD)bf16 on the
    #      MXU with f32 accumulation; CLIP mean/std preprocess is folded in w/b ----
    img = jnp.dot(pooled_ref[...], w_img_ref[...],
                  preferred_element_type=jnp.float32)            # (B_PAD, EMBED_PAD) f32
    img = img + b_img_ref[...]                                   # bias broadcast (1, EMBED_PAD)
    img_n = img * jax.lax.rsqrt(
        jnp.sum(img * img, axis=-1, keepdims=True) + 1e-12)      # f32 L2 normalize

    # ---- text encoder, produced directly transposed: (EMBED_PAD, VOCAB_PAD)bf16 @
    #      (VOCAB_PAD, T_PAD)bf16 -> (EMBED_PAD, T_PAD) f32; no later transpose needed ----
    txt_t = jnp.dot(w_txt_t_ref[...], counts_t_ref[...],
                    preferred_element_type=jnp.float32)          # (EMBED_PAD, T_PAD)
    inv_tn = jax.lax.rsqrt(
        jnp.sum(txt_t * txt_t, axis=0, keepdims=True) + 1e-12)   # (1, T_PAD) text norm

    # ---- similarity: plain f32 matmul, text L2-norm folded into the logits ----
    sim = jnp.dot(img_n, txt_t, preferred_element_type=jnp.float32)   # (B_PAD, T_PAD)
    logits = LOGIT_SCALE * sim * inv_tn + mask_ref[...]               # padded prompts -> -inf

    # ---- softmax (strictly f32) ----
    m = jnp.max(logits, axis=-1, keepdims=True)
    e = jnp.exp(logits - m)
    probs_ref[...] = e / jnp.sum(e, axis=-1, keepdims=True)


# ----------------------------- pallas_call wrapper ------------------------------
def _icnm_probs(pooled, w_img, b_img, w_txt_t, counts_t, mask):
    b_pad = pooled.shape[0]
    vmem = pl.BlockSpec(memory_space=pltpu.MemorySpace.VMEM)     # untiled, whole array in VMEM
    return pl.pallas_call(
        _icnm_fused_kernel,
        out_shape=jax.ShapeDtypeStruct((b_pad, T_PAD), jnp.float32),
        in_specs=[vmem] * 6,
        out_specs=vmem,
    )(pooled, w_img, b_img, w_txt_t, counts_t, mask)


# ------------------------------ host-side glue -----------------------------------
def _pool_patches(images):
    """(B, 3, H, W) raw images -> (B, PATCH_DIM) patch-mean (linearity: pool before matmul)."""
    b = images.shape[0]
    x = images.reshape(b, 3, IMG_SIZE // PATCH, PATCH, IMG_SIZE // PATCH, PATCH)
    pooled = jnp.mean(x, axis=(2, 4))                            # (B, 3, PATCH, PATCH)
    return pooled.reshape(b, PATCH_DIM)


class ICNMLossPallas:
    """Pallas re-implementation of ICNMLoss.forward with synthetic CLIP weights."""

    def __init__(self):
        key = jax.random.PRNGKey(0)
        k1, k2, k3, k4 = jax.random.split(key, 4)
        w_patch = jax.random.normal(k1, (PATCH_DIM, WIDTH), jnp.float32) * 0.02
        w_img_proj = jax.random.normal(k2, (WIDTH, EMBED), jnp.float32) * 0.02
        tok_embedding = jax.random.normal(k3, (VOCAB, TXT_DIM), jnp.float32) * 0.02
        w_txt_proj = jax.random.normal(k4, (TXT_DIM, EMBED), jnp.float32) * 0.02

        # ---- collapse linear image encoder; fold CLIP mean/std affine preprocess ----
        w_img_small = w_patch @ w_img_proj                        # (PATCH_DIM, EMBED) f32
        scale = jnp.repeat(jnp.asarray(1.0 / CLIP_STD), PATCH * PATCH)          # (192,)
        shift = jnp.repeat(jnp.asarray(CLIP_MEAN / CLIP_STD), PATCH * PATCH)    # (192,)
        w_img_fused = scale[:, None] * w_img_small
        b_img = -(shift @ w_img_small)
        self.w_img = (jnp.zeros((PATCH_DIM, EMBED_PAD), jnp.float32)
                      .at[:, :EMBED].set(w_img_fused).astype(jnp.bfloat16))
        self.b_img = jnp.zeros((1, EMBED_PAD), jnp.float32).at[0, :EMBED].set(b_img)

        # ---- collapse linear text encoder; fold 1/CTX_LEN; pre-transpose for the kernel ----
        w_txt_fused = (tok_embedding @ w_txt_proj) / CTX_LEN      # (VOCAB, EMBED)
        self.w_txt_t = (jnp.zeros((EMBED_PAD, VOCAB_PAD), jnp.float32)
                        .at[:EMBED, :VOCAB].set(w_txt_fused.T).astype(jnp.bfloat16))

        self._tok_cache = {}

        @jax.jit
        def _forward(images, counts_t, mask, w_img, b_img, w_txt_t):
            b = images.shape[0]
            b_pad = max(8, ((b + 7) // 8) * 8)                    # sublane-stack batch
            pooled = _pool_patches(images)                        # (B, PATCH_DIM) f32
            pooled = (jnp.zeros((b_pad, PATCH_DIM), jnp.float32)
                      .at[:b].set(pooled).astype(jnp.bfloat16))
            return _icnm_probs(pooled, w_img, b_img, w_txt_t, counts_t, mask)

        self._forward = _forward

    def _tokenize(self, prompts):
        """Deterministic synthetic tokenizer (stands in for clip.tokenize), cached.

        Returns transposed integer token counts (VOCAB_PAD, T_PAD) bf16 (1/CTX_LEN is
        folded into the text weight) and a (1, T_PAD) additive logit mask.
        """
        if prompts in self._tok_cache:
            return self._tok_cache[prompts]
        t = len(prompts)
        assert 1 <= t <= T_PAD
        counts_t = np.zeros((VOCAB_PAD, T_PAD), np.float32)
        for i, p in enumerate(prompts):
            ids = [(ord(ch) % (VOCAB - 1)) + 1 for ch in p[:CTX_LEN]]
            ids += [0] * (CTX_LEN - len(ids))                     # pad token id 0, pooled
            for tok in ids:
                counts_t[tok, i] += 1.0
        mask = np.full((1, T_PAD), NEG_INF, np.float32)
        mask[0, :t] = 0.0
        out = (jnp.asarray(counts_t, jnp.bfloat16), jnp.asarray(mask))
        self._tok_cache[prompts] = out
        return out

    def __call__(self, image, prompts):
        counts_t, mask = self._tokenize(tuple(prompts))
        images = image if image.ndim == 4 else image[None]        # (B, 3, H, W)
        probs = self._forward(images, counts_t, mask,
                              self.w_img, self.b_img, self.w_txt_t)
        return probs[: images.shape[0], : len(prompts)]


# ----------------------------------- main ---------------------------------------
if __name__ == "__main__":
    key = jax.random.PRNGKey(0)
    k_img, k_batch = jax.random.split(key)
    image = jax.random.uniform(k_img, (3, IMG_SIZE, IMG_SIZE), jnp.float32)
    batch = jax.random.uniform(k_batch, (2, 3, IMG_SIZE, IMG_SIZE), jnp.float32)
    prompts = ["a cat", "a dog", "a bird", "a fish"]

    loss = ICNMLossPallas()

    # single image, matching the original module's signature
    probs = jax.block_until_ready(loss(image, prompts))
    probs_np = np.asarray(probs)
    assert probs_np.shape == (1, len(prompts))
    assert np.isfinite(probs_np).all() and (probs_np >= 0.0).all()
    assert abs(float(probs_np.sum()) - 1.0) < 1e-4

    # batched images (sublane-stacked in one kernel launch)
    probs_b = jax.block_until_ready(loss(batch, prompts))
    probs_b_np = np.asarray(probs_b)
    assert probs_b_np.shape == (2, len(prompts))
    assert np.isfinite(probs_b_np).all() and (probs_b_np >= 0.0).all()
    assert float(np.abs(probs_b_np.sum(axis=-1) - 1.0).max()) < 1e-4

    print("KERNEL_OK")
</pallas_src>

<mosaic_0001>
module attributes {stable_mosaic.version = 11 : i64} {
  func.func @_icnm_fused_kernel(%arg0: memref<8x192xbf16, #tpu.memory_space<vmem>>, %arg1: memref<192x128xbf16, #tpu.memory_space<vmem>>, %arg2: memref<1x128xf32, #tpu.memory_space<vmem>>, %arg3: memref<128x128xbf16, #tpu.memory_space<vmem>>, %arg4: memref<128x128xbf16, #tpu.memory_space<vmem>>, %arg5: memref<1x128xf32, #tpu.memory_space<vmem>>, %arg6: memref<8x128xf32, #tpu.memory_space<vmem>>) attributes {dimension_semantics = [], scalar_prefetch = 0 : i64, scratch_operands = 0 : i64, tpu.core_type = #tpu.core_type<tc>} {
    %c0 = arith.constant 0 : index
    %c0_0 = arith.constant 0 : index
    %0 = vector.load %arg0[%c0, %c0_0] : memref<8x192xbf16, #tpu.memory_space<vmem>>, vector<8x192xbf16>
    %c0_1 = arith.constant 0 : index
    %c0_2 = arith.constant 0 : index
    %1 = vector.load %arg1[%c0_1, %c0_2] : memref<192x128xbf16, #tpu.memory_space<vmem>>, vector<192x128xbf16>
    %cst = arith.constant dense<0.000000e+00> : vector<8x128xf32>
    %2 = tpu.matmul %0, %1, %cst {dimension_numbers = #tpu.dot_dimension_numbers<[1], [0], [0], [1], [0, 0, 1, 1], [], []>} : vector<8x192xbf16>, vector<192x128xbf16>, vector<8x128xf32> -> vector<8x128xf32>
    %c0_3 = arith.constant 0 : index
    %c0_4 = arith.constant 0 : index
    %3 = vector.load %arg2[%c0_3, %c0_4] : memref<1x128xf32, #tpu.memory_space<vmem>>, vector<1x128xf32>
    %4 = vector.broadcast %3 : vector<1x128xf32> to vector<8x128xf32>
    %5 = arith.addf %2, %4 : vector<8x128xf32>
    %6 = arith.mulf %5, %5 : vector<8x128xf32>
    %cst_5 = arith.constant dense<0.000000e+00> : vector<8xf32>
    %7 = vector.multi_reduction <add>, %6, %cst_5 [1] : vector<8x128xf32> to vector<8xf32>
    %8 = vector.shape_cast %7 : vector<8xf32> to vector<8x1xf32>
    %cst_6 = arith.constant 9.99999996E-13 : f32
    %9 = vector.broadcast %cst_6 : f32 to vector<8x1xf32>
    %10 = arith.addf %8, %9 : vector<8x1xf32>
    %11 = math.rsqrt %10 : vector<8x1xf32>
    %12 = vector.broadcast %11 : vector<8x1xf32> to vector<8x128xf32>
    %13 = arith.mulf %5, %12 : vector<8x128xf32>
    %c0_7 = arith.constant 0 : index
    %c0_8 = arith.constant 0 : index
    %14 = vector.load %arg3[%c0_7, %c0_8] : memref<128x128xbf16, #tpu.memory_space<vmem>>, vector<128x128xbf16>
    %c0_9 = arith.constant 0 : index
    %c0_10 = arith.constant 0 : index
    %15 = vector.load %arg4[%c0_9, %c0_10] : memref<128x128xbf16, #tpu.memory_space<vmem>>, vector<128x128xbf16>
    %cst_11 = arith.constant dense<0.000000e+00> : vector<128x128xf32>
    %16 = tpu.matmul %14, %15, %cst_11 {dimension_numbers = #tpu.dot_dimension_numbers<[1], [0], [0], [1], [0, 0, 1, 1], [], []>} : vector<128x128xbf16>, vector<128x128xbf16>, vector<128x128xf32> -> vector<128x128xf32>
    %17 = arith.mulf %16, %16 : vector<128x128xf32>
    %cst_12 = arith.constant dense<0.000000e+00> : vector<128xf32>
    %18 = vector.multi_reduction <add>, %17, %cst_12 [0] : vector<128x128xf32> to vector<128xf32>
    %19 = vector.shape_cast %18 : vector<128xf32> to vector<1x128xf32>
    %cst_13 = arith.constant 9.99999996E-13 : f32
    %20 = vector.broadcast %cst_13 : f32 to vector<1x128xf32>
    %21 = arith.addf %19, %20 : vector<1x128xf32>
    %22 = math.rsqrt %21 : vector<1x128xf32>
    %cst_14 = arith.constant dense<0.000000e+00> : vector<8x128xf32>
    %23 = tpu.matmul %13, %16, %cst_14 {dimension_numbers = #tpu.dot_dimension_numbers<[1], [0], [0], [1], [0, 0, 1, 1], [], []>} : vector<8x128xf32>, vector<128x128xf32>, vector<8x128xf32> -> vector<8x128xf32>
    %cst_15 = arith.constant 14.2857141 : f32
    %24 = vector.broadcast %cst_15 : f32 to vector<8x128xf32>
    %25 = arith.mulf %24, %23 : vector<8x128xf32>
    %26 = vector.broadcast %22 : vector<1x128xf32> to vector<8x128xf32>
    %27 = arith.mulf %25, %26 : vector<8x128xf32>
    %c0_16 = arith.constant 0 : index
    %c0_17 = arith.constant 0 : index
    %28 = vector.load %arg5[%c0_16, %c0_17] : memref<1x128xf32, #tpu.memory_space<vmem>>, vector<1x128xf32>
    %29 = vector.broadcast %28 : vector<1x128xf32> to vector<8x128xf32>
    %30 = arith.addf %27, %29 : vector<8x128xf32>
    %cst_18 = arith.constant dense<0xFF800000> : vector<8xf32>
    %31 = vector.multi_reduction <maximumf>, %30, %cst_18 [1] : vector<8x128xf32> to vector<8xf32>
    %32 = vector.shape_cast %31 : vector<8xf32> to vector<8x1xf32>
    %33 = vector.broadcast %32 : vector<8x1xf32> to vector<8x128xf32>
    %34 = arith.subf %30, %33 : vector<8x128xf32>
    %35 = math.exp %34 : vector<8x128xf32>
    %cst_19 = arith.constant dense<0.000000e+00> : vector<8xf32>
    %36 = vector.multi_reduction <add>, %35, %cst_19 [1] : vector<8x128xf32> to vector<8xf32>
    %37 = vector.shape_cast %36 : vector<8xf32> to vector<8x1xf32>
    %38 = vector.broadcast %37 : vector<8x1xf32> to vector<8x128xf32>
    %39 = arith.divf %35, %38 : vector<8x128xf32>
    %c0_20 = arith.constant 0 : index
    %c0_21 = arith.constant 0 : index
    %40 = vector.load %arg6[%c0_20, %c0_21] : memref<8x128xf32, #tpu.memory_space<vmem>>, vector<8x128xf32>
    tpu.vector_store %arg6[%c0_20, %c0_21], %39 {strides = array<i32>} : memref<8x128xf32, #tpu.memory_space<vmem>>, vector<8x128xf32>,
    return
  }
}

</mosaic_0001>

<llo_original>
// kernel: _forward.1
$region0: #{_forward.1}
  #allocation0 [shape = 'u32[]', space=smem, size = 0x4, offset = 0x4, fixed_abs, tag = 'smem constant byte address 0x4 - core index']
  #allocation1 [shape = 'u32[72,128]{1,0:T(1,128)}', space=vmem, size = 0x9000, scoped, tag = 'internal scratch']
  %s0 = inlined_call_operand.vmem [shape: bf16[8,192], index: 0, kind: input, shape index: {}]
  %s1 = inlined_call_operand.vmem [shape: bf16[192,128], index: 1, kind: input, shape index: {}]
  %s2 = inlined_call_operand.vmem [shape: f32[1,128], index: 2, kind: input, shape index: {}]
  %s3 = inlined_call_operand.vmem [shape: bf16[128,128], index: 3, kind: input, shape index: {}]
  %s4 = inlined_call_operand.vmem [shape: bf16[128,128], index: 4, kind: input, shape index: {}]
  %s5 = inlined_call_operand.vmem [shape: f32[1,128], index: 5, kind: input, shape index: {}]
  %s6 = inlined_call_operand.hbm [shape: f32[8,128], index: 6, kind: output, shape index: {}]
  %s7 = sld [smem:[#allocation0]]
  $region34: #{_forward.1} parent=0
    _
  %s9 = ssub.s32 1, %s7
  %s10 = scalar_select 0, %s9, %s7
  $region1: #{_forward.1} parent=0
    #allocation2 [shape = 'u8[4096]{0}', space=vmem, size = 0x1000, scoped, tag = 'output window, operand 0, single buffered']
    #allocation3 [shape = 's32[1]{0}', space=sflag, size = 0x4, scoped, tag = 'scoped memory for _forward.1']
    %11 = vsyncpa [#allocation3], 0
    // Predicated region
    $region2: #{_forward.1} parent=1 // pred_check
      _
    $region3: #{_forward.1} parent=1 // pred_check_branch
      %13 = sbr.rel (0) target = $region5
    $region4: #{_forward.1} parent=1 // pred_region
      _
    $region5: #{_forward.1} parent=1 // pred_fallthru
      _
    // Predicated region
    $region6: #{_forward.1} parent=1 // pred_check
      _
    $region7: #{_forward.1} parent=1 // pred_check_branch
      %15 = sbr.rel (0) target = $region9
    $region8: #{_forward.1} parent=1 // pred_region
      _
    $region9: #{_forward.1} parent=1 // pred_fallthru
      _
    // Predicated region
    $region10: #{_forward.1} parent=1 // pred_check
      _
    $region11: #{_forward.1} parent=1 // pred_check_branch
      %17 = sbr.rel (0) target = $region13
    $region12: #{_forward.1} parent=1 // pred_region
      _
    $region13: #{_forward.1} parent=1 // pred_fallthru
      _
    // Predicated region
    $region14: #{_forward.1} parent=1 // pred_check
      _
    $region15: #{_forward.1} parent=1 // pred_check_branch
      %19 = sbr.rel (0) target = $region17
    $region16: #{_forward.1} parent=1 // pred_region
      _
    $region17: #{_forward.1} parent=1 // pred_fallthru
      _
    // Predicated region
    $region18: #{_forward.1} parent=1 // pred_check
      _
    $region19: #{_forward.1} parent=1 // pred_check_branch
      %21 = sbr.rel (0) target = $region21
    $region20: #{_forward.1} parent=1 // pred_region
      _
    $region21: #{_forward.1} parent=1 // pred_fallthru
      _
    // Predicated region
    $region22: #{_forward.1} parent=1 // pred_check
      _
    $region23: #{_forward.1} parent=1 // pred_check_branch
      %23 = sbr.rel (0) target = $region25
    $region24: #{_forward.1} parent=1 // pred_region
      _
    $region25: #{_forward.1} parent=1 // pred_fallthru
      _
    %v25 = vld [vmem:[%s0] sm:$0xff]
    %v26 = vld [vmem:[%s1] sm:$0xf]
    %v27 = vld [vmem:[%s1 + $0x4] sm:$0xf]
    %v28 = vld [vmem:[%s1 + $0x8] sm:$0xf]
    %v29 = vld [vmem:[%s1 + $0xc] sm:$0xf]
    %v30 = vld [vmem:[%s1 + $0x10] sm:$0xf]
    %v31 = vld [vmem:[%s1 + $0x14] sm:$0xf]
    %v32 = vld [vmem:[%s1 + $0x18] sm:$0xf]
    %v33 = vld [vmem:[%s1 + $0x1c] sm:$0xf]
    %v34 = vld [vmem:[%s1 + $0x20] sm:$0xf]
    %v35 = vld [vmem:[%s1 + $0x24] sm:$0xf]
    %v36 = vld [vmem:[%s1 + $0x28] sm:$0xf]
    %v37 = vld [vmem:[%s1 + $0x2c] sm:$0xf]
    %v38 = vld [vmem:[%s1 + $0x30] sm:$0xf]
    %v39 = vld [vmem:[%s1 + $0x34] sm:$0xf]
    %v40 = vld [vmem:[%s1 + $0x38] sm:$0xf]
    %v41 = vld [vmem:[%s1 + $0x3c] sm:$0xf]
    %v42 = vld [vmem:[%s1 + $0x40] sm:$0xf]
    %v43 = vld [vmem:[%s1 + $0x44] sm:$0xf]
    %v44 = vld [vmem:[%s1 + $0x48] sm:$0xf]
    %v45 = vld [vmem:[%s1 + $0x4c] sm:$0xf]
    %v46 = vld [vmem:[%s1 + $0x50] sm:$0xf]
    %v47 = vld [vmem:[%s1 + $0x54] sm:$0xf]
    %v48 = vld [vmem:[%s1 + $0x58] sm:$0xf]
    %v49 = vld [vmem:[%s1 + $0x5c] sm:$0xf]
    %v50 = vld [vmem:[%s2] sm:$0x1]
    %v52 = vperm.slane %v50, 0
    %v55 = vunpack.c.l.b16 %v25
    %v56 = vunpack.c.h.b16 %v25
    %v57 = vpack.c.b16 %v55, %v55
    %v58 = vpack.c.b16 %v56, %v56
    %v84 = vunpack.c.l.b16 %v26
    %v85 = vunpack.c.l.b16 %v27
    %v86 = vunpack.c.l.b16 %v28
    %v87 = vunpack.c.l.b16 %v29
    %v88 = vunpack.c.l.b16 %v30
    %v89 = vunpack.c.l.b16 %v31
    %v90 = vunpack.c.l.b16 %v32
    %v91 = vunpack.c.l.b16 %v33
    %v92 = vunpack.c.l.b16 %v34
    %v93 = vunpack.c.l.b16 %v35
    %v94 = vunpack.c.l.b16 %v36
    %v95 = vunpack.c.l.b16 %v37
    %v96 = vunpack.c.l.b16 %v38
    %v97 = vunpack.c.l.b16 %v39
    %v98 = vunpack.c.l.b16 %v40
    %v99 = vunpack.c.l.b16 %v41
    %v100 = vunpack.c.l.b16 %v42
    %v101 = vunpack.c.l.b16 %v43
    %v102 = vunpack.c.l.b16 %v44
    %v103 = vunpack.c.l.b16 %v45
    %v104 = vunpack.c.l.b16 %v46
    %v105 = vunpack.c.l.b16 %v47
    %v106 = vunpack.c.l.b16 %v48
    %v107 = vunpack.c.l.b16 %v49
    %v108 = vpack.c.b16 %v85, %v84
    %v109 = vpack.c.b16 %v87, %v86
    %v110 = vpack.c.b16 %v89, %v88
    %v111 = vpack.c.b16 %v91, %v90
    %v112 = vpack.c.b16 %v93, %v92
    %v113 = vpack.c.b16 %v95, %v94
    %v114 = vpack.c.b16 %v97, %v96
    %v115 = vpack.c.b16 %v99, %v98
    %v116 = vpack.c.b16 %v101, %v100
    %v117 = vpack.c.b16 %v103, %v102
    %v118 = vpack.c.b16 %v105, %v104
    %v119 = vpack.c.b16 %v107, %v106
    %vm132 = vcmask 523264
    %v134 = vsel %vm132, %v58, 0
    %136 = vmatpush.bf16.msra.mxu0 %v115
    %137 = vmatpush.bf16.msra.mxu0 %v114
    %138 = vmatpush.bf16.msra.mxu0 %v113
    %139 = vmatpush.bf16.msra.mxu0 %v112
    %140 = vmatpush.bf16.msra.mxu0 %v111
    %141 = vmatpush.bf16.msra.mxu0 %v110
    %142 = vmatpush.bf16.msra.mxu0 %v109
    %143 = vmatpush.bf16.msra.mxu0 %v108
    %144 = vmatmul.bf16.gmra.mxu0 %v57
    %v145 = vpop.f32.mrf.mxu0
    %v146 = vadd.f32 %v52, %v145
    %v147 = vpop.f32.mrf.mxu0
    %148 = vdwg.mxu0
    %149 = vmatpush.bf16.msra.mxu0 0
    %150 = vmatpush.bf16.msra.mxu0 0
    %151 = vmatpush.bf16.msra.mxu0 0
    %152 = vmatpush.bf16.msra.mxu0 0
    %153 = vmatpush.bf16.msra.mxu0 %v119
    %154 = vmatpush.bf16.msra.mxu0 %v118
    %155 = vmatpush.bf16.msra.mxu0 %v117
    %156 = vmatpush.bf16.msra.mxu0 %v116
    %157 = vmatmul.bf16.gmra.mxu0 %v134
    %v158 = vpop.f32.mrf.mxu0
    %v159 = vadd.f32 %v146, %v158
    %v160 = vpop.f32.mrf.mxu0
    %161 = vdwg.mxu0
    %v162 = vmul.f32 %v159, %v159
    %163 = vadd.xlane.f32.xlu0 %v162
    %v164 = vpop.xlane.xlu0 %163
    %v165 = vadd.f32 %v164, 1e-12
    %v166 = vrsqrt.pop %v165
    %v167 = vmul.f32 %v166, %v165
    %v168 = vmul.f32 %v167, %v166
    %v169 = vmul.f32 0.5, %v168
    %v170 = vsub.f32 1.5, %v169
    %v171 = vmul.f32 %v166, %v170
    %vm172 = vweird.f32 %v165
    %vm173 = vweird.f32 %v166
    %vm174 = vmor %vm172, %vm173
    %v175 = vsel %vm174, %v166, %v171
    %v176 = vmul.f32 %v159, %v175
    %v177 = vld [vmem:[%s3] sm:$0xf]
    %v178 = vld [vmem:[%s3 + $0x4] sm:$0xf]
    %v179 = vld [vmem:[%s3 + $0x8] sm:$0xf]
    %v180 = vld [vmem:[%s3 + $0xc] sm:$0xf]
    %v181 = vld [vmem:[%s3 + $0x10] sm:$0xf]
    %v182 = vld [vmem:[%s3 + $0x14] sm:$0xf]
    %v183 = vld [vmem:[%s3 + $0x18] sm:$0xf]
    %v184 = vld [vmem:[%s3 + $0x1c] sm:$0xf]
    %v185 = vld [vmem:[%s3 + $0x20] sm:$0xf]
    %v186 = vld [vmem:[%s3 + $0x24] sm:$0xf]
    %v187 = vld [vmem:[%s3 + $0x28] sm:$0xf]
    %v188 = vld [vmem:[%s3 + $0x2c] sm:$0xf]
    %v189 = vld [vmem:[%s3 + $0x30] sm:$0xf]
    %v190 = vld [vmem:[%s3 + $0x34] sm:$0xf]
    %v191 = vld [vmem:[%s3 + $0x38] sm:$0xf]
    %v192 = vld [vmem:[%s3 + $0x3c] sm:$0xf]
    %v193 = vld [vmem:[%s4] sm:$0xf]
    %v194 = vld [vmem:[%s4 + $0x4] sm:$0xf]
    %v195 = vld [vmem:[%s4 + $0x8] sm:$0xf]
    %v196 = vld [vmem:[%s4 + $0xc] sm:$0xf]
    %v197 = vld [vmem:[%s4 + $0x10] sm:$0xf]
    %v198 = vld [vmem:[%s4 + $0x14] sm:$0xf]
    %v199 = vld [vmem:[%s4 + $0x18] sm:$0xf]
    %v200 = vld [vmem:[%s4 + $0x1c] sm:$0xf]
    %v201 = vld [vmem:[%s4 + $0x20] sm:$0xf]
    %v202 = vld [vmem:[%s4 + $0x24] sm:$0xf]
    %v203 = vld [vmem:[%s4 + $0x28] sm:$0xf]
    %v204 = vld [vmem:[%s4 + $0x2c] sm:$0xf]
    %v205 = vld [vmem:[%s4 + $0x30] sm:$0xf]
    %v206 = vld [vmem:[%s4 + $0x34] sm:$0xf]
    %v207 = vld [vmem:[%s4 + $0x38] sm:$0xf]
    %v208 = vld [vmem:[%s4 + $0x3c] sm:$0xf]
    %v225 = vunpack.c.l.b16 %v177
    %v226 = vunpack.c.l.b16 %v178
    %v227 = vunpack.c.l.b16 %v179
    %v228 = vunpack.c.l.b16 %v180
    %v229 = vunpack.c.l.b16 %v181
    %v230 = vunpack.c.l.b16 %v182
    %v231 = vunpack.c.l.b16 %v183
    %v232 = vunpack.c.l.b16 %v184
    %v233 = vunpack.c.l.b16 %v185
    %v234 = vunpack.c.l.b16 %v186
    %v235 = vunpack.c.l.b16 %v187
    %v236 = vunpack.c.l.b16 %v188
    %v237 = vunpack.c.l.b16 %v189
    %v238 = vunpack.c.l.b16 %v190
    %v239 = vunpack.c.l.b16 %v191
    %v240 = vunpack.c.l.b16 %v192
    %v241 = vpack.c.b16 %v226, %v225
    %v242 = vpack.c.b16 %v228, %v227
    %v243 = vpack.c.b16 %v230, %v229
    %v244 = vpack.c.b16 %v232, %v231
    %v245 = vpack.c.b16 %v234, %v233
    %v246 = vpack.c.b16 %v236, %v235
    %v247 = vpack.c.b16 %v238, %v237
    %v248 = vpack.c.b16 %v240, %v239
    %v273 = vunpack.c.l.b16 %v193
    %v274 = vunpack.c.l.b16 %v194
    %v275 = vunpack.c.l.b16 %v195
    %v276 = vunpack.c.l.b16 %v196
    %v277 = vunpack.c.l.b16 %v197
    %v278 = vunpack.c.l.b16 %v198
    %v279 = vunpack.c.l.b16 %v199
    %v280 = vunpack.c.l.b16 %v200
    %v281 = vunpack.c.l.b16 %v201
    %v282 = vunpack.c.l.b16 %v202
    %v283 = vunpack.c.l.b16 %v203
    %v284 = vunpack.c.l.b16 %v204
    %v285 = vunpack.c.l.b16 %v205
    %v286 = vunpack.c.l.b16 %v206
    %v287 = vunpack.c.l.b16 %v207
    %v288 = vunpack.c.l.b16 %v208
    %v289 = vpack.c.b16 %v274, %v273
    %v290 = vpack.c.b16 %v276, %v275
    %v291 = vpack.c.b16 %v278, %v277
    %v292 = vpack.c.b16 %v280, %v279
    %v293 = vpack.c.b16 %v282, %v281
    %v294 = vpack.c.b16 %v284, %v283
    %v295 = vpack.c.b16 %v286, %v285
    %v296 = vpack.c.b16 %v288, %v287
    %305 = vmatpush.bf16.msra.mxu0 %v296
    %306 = vmatpush.bf16.msra.mxu0 %v295
    %307 = vmatpush.bf16.msra.mxu0 %v294
    %308 = vmatpush.bf16.msra.mxu0 %v293
    %309 = vmatpush.bf16.msra.mxu0 %v292
    %310 = vmatpush.bf16.msra.mxu0 %v291
    %311 = vmatpush.bf16.msra.mxu0 %v290
    %312 = vmatpush.bf16.msra.mxu0 %v289
    %313 = vmatmul.bf16.gmra.mxu0 %v241
    %v314 = vpop.f32.mrf.mxu0
    %v315 = vadd.f32 0.0, %v314
    %v316 = vpop.f32.mrf.mxu0
    %v317 = vadd.f32 0.0, %v316
    %318 = vmatmul.bf16.gmra.mxu0 %v242
    %v319 = vpop.f32.mrf.mxu0
    %v320 = vadd.f32 0.0, %v319
    %v321 = vpop.f32.mrf.mxu0
    %v322 = vadd.f32 0.0, %v321
    %323 = vmatmul.bf16.gmra.mxu0 %v243
    %v324 = vpop.f32.mrf.mxu0
    %v325 = vadd.f32 0.0, %v324
    %v326 = vpop.f32.mrf.mxu0
    %v327 = vadd.f32 0.0, %v326
    %328 = vmatmul.bf16.gmra.mxu0 %v244
    %v329 = vpop.f32.mrf.mxu0
    %v330 = vadd.f32 0.0, %v329
    %v331 = vpop.f32.mrf.mxu0
    %v332 = vadd.f32 0.0, %v331
    %333 = vmatmul.bf16.gmra.mxu0 %v245
    %v334 = vpop.f32.mrf.mxu0
    %v335 = vadd.f32 0.0, %v334
    %v336 = vpop.f32.mrf.mxu0
    %v337 = vadd.f32 0.0, %v336
    %338 = vmatmul.bf16.gmra.mxu0 %v246
    %v339 = vpop.f32.mrf.mxu0
    %v340 = vadd.f32 0.0, %v339
    %v341 = vpop.f32.mrf.mxu0
    %v342 = vadd.f32 0.0, %v341
    %343 = vmatmul.bf16.gmra.mxu0 %v247
    %v344 = vpop.f32.mrf.mxu0
    %v345 = vadd.f32 0.0, %v344
    %v346 = vpop.f32.mrf.mxu0
    %v347 = vadd.f32 0.0, %v346
    %348 = vmatmul.bf16.gmra.mxu0 %v248
    %v349 = vpop.f32.mrf.mxu0
    %v350 = vadd.f32 0.0, %v349
    %v351 = vpop.f32.mrf.mxu0
    %v352 = vadd.f32 0.0, %v351
    %353 = vdwg.mxu0
    %v354 = vmul.f32 %v315, %v315
    %v355 = vmul.f32 %v317, %v317
    %v356 = vmul.f32 %v320, %v320
    %v357 = vmul.f32 %v322, %v322
    %v358 = vmul.f32 %v325, %v325
    %v359 = vmul.f32 %v327, %v327
    %v360 = vmul.f32 %v330, %v330
    %v361 = vmul.f32 %v332, %v332
    %v362 = vmul.f32 %v335, %v335
    %v363 = vmul.f32 %v337, %v337
    %v364 = vmul.f32 %v340, %v340
    %v365 = vmul.f32 %v342, %v342
    %v366 = vmul.f32 %v345, %v345
    %v367 = vmul.f32 %v347, %v347
    %v368 = vmul.f32 %v350, %v350
    %v369 = vmul.f32 %v352, %v352
    %v370 = vadd.f32 %v354, %v355
    %v371 = vadd.f32 %v370, %v356
    %v372 = vadd.f32 %v371, %v357
    %v373 = vadd.f32 %v372, %v358
    %v374 = vadd.f32 %v373, %v359
    %v375 = vadd.f32 %v374, %v360
    %v376 = vadd.f32 %v375, %v361
    %v377 = vadd.f32 %v376, %v362
    %v378 = vadd.f32 %v377, %v363
    %v379 = vadd.f32 %v378, %v364
    %v380 = vadd.f32 %v379, %v365
    %v381 = vadd.f32 %v380, %v366
    %v382 = vadd.f32 %v381, %v367
    %v383 = vadd.f32 %v382, %v368
    %v384 = vadd.f32 %v383, %v369
    %v385 = vrot.slane %v384, 4
    %v386 = vadd.f32 %v384, %v385
    %v387 = vrot.slane %v386, 2
    %v388 = vadd.f32 %v386, %v387
    %v389 = vrot.slane %v388, 1
    %v390 = vadd.f32 %v388, %v389
    %v391 = vadd.f32 %v390, 1e-12
    %v392 = vrsqrt.pop %v391
    %v393 = vmul.f32 %v392, %v391
    %v394 = vmul.f32 %v393, %v392
    %v395 = vmul.f32 0.5, %v394
    %v396 = vsub.f32 1.5, %v395
    %v397 = vmul.f32 %v392, %v396
    %vm398 = vweird.f32 %v391
    %vm399 = vweird.f32 %v392
    %vm400 = vmor %vm398, %vm399
    %v401 = vsel %vm400, %v392, %v397
    %402 = vmatpush.msra.mxu0 %v352
    %403 = vmatpush.msra.mxu0 %v350
    %404 = vmatpush.msra.mxu0 %v347
    %405 = vmatpush.msra.mxu0 %v345
    %406 = vmatpush.msra.mxu0 %v342
    %407 = vmatpush.msra.mxu0 %v340
    %408 = vmatpush.msra.mxu0 %v337
    %409 = vmatpush.msra.mxu0 %v335
    %410 = vmatpush.msra.mxu0 %v332
    %411 = vmatpush.msra.mxu0 %v330
    %412 = vmatpush.msra.mxu0 %v327
    %413 = vmatpush.msra.mxu0 %v325
    %414 = vmatpush.msra.mxu0 %v322
    %415 = vmatpush.msra.mxu0 %v320
    %416 = vmatpush.msra.mxu0 %v317
    %417 = vmatpush.msra.mxu0 %v315
    %418 = vmatmul.f32.gmra.mxu0 %v176
    %v419 = vpop.f32.mrf.mxu0
    %v420 = vadd.f32 0.0, %v419
    %421 = vdwg.mxu0
    %v422 = vmul.f32 %v420, 14.285714
    %v423 = vmul.f32 %v422, %v401
    %v424 = vld [vmem:[%s5] sm:$0x1]
    %v426 = vperm.slane %v424, 0
    %v428 = vadd.f32 %v423, %v426
    %429 = vmax.xlane.f32.xlu0 %v428
    %v430 = vpop.xlane.xlu0 %429
    %v431 = vsub.f32 %v428, %v430
    %v432 = vmul.f32 %v431, 1.442695
    %v433 = vpow.pop %v432
    %434 = vadd.xlane.f32.xlu0 %v433
    %v435 = vpop.xlane.xlu0 %434
    %v436 = vrcp.pop %v435
    %v437 = vmul.f32 %v435, %v436
    %v438 = vsub.f32 1.0, %v437
    %v439 = vmul.f32 %v436, %v438
    %v440 = vadd.f32 %v436, %v439
    %vm441 = vweird.f32 %v435
    %vm442 = vweird.f32 %v436
    %vm443 = vmor %vm441, %vm442
    %v444 = vsel %vm443, %v436, %v440
    %v445 = vand.u32 2147483647, %v435
    %vm446 = vcmp.eq.f32.partialorder %v445, 8.507059e+37
    %v447 = vand.u32 %v435, 2147483648
    %v448 = vor.u32 1.1754944e-38, %v447
    %v449 = vsel %vm446, %v448, %v444
    %v450 = vmul.f32 %v433, %v449
    %451 = vst [vmem:[#allocation2] sm:$0xff] %v450
    // Predicated region
    $region26: #{_forward.1} parent=1 // pred_check
      _
    $region27: #{_forward.1} parent=1 // pred_check_branch
      %453 = sbr.rel (0) target = $region29
    $region28: #{_forward.1} parent=1 // pred_region
      %455 = vsyncadd [#allocation3], 0
      %s457 = sshll.u32 [#allocation2], 4
      %s458 = int_to_ptr.vmem [resolvable:$true] %s457
      %s459 = sshll.u32 %s6, 4
      %s460 = int_to_ptr.hbm [resolvable:$true] %s459
      %462 = dma.vmem_to_hbm [thread:$0]  %s458, 128, %s460, [#allocation3]
    $region29: #{_forward.1} parent=1 // pred_fallthru
      _
    // Predicated region
    $region30: #{_forward.1} parent=1 // pred_check
      _
    $region31: #{_forward.1} parent=1 // pred_check_branch
      %464 = sbr.rel (0) target = $region33
    $region32: #{_forward.1} parent=1 // pred_region
      %466 = dma.done [#allocation3], 128
    $region33: #{_forward.1} parent=1 // pred_fallthru
      _
    %467 = vsyncpa [#allocation3], 1

</llo_original>
